<compile_context>
chip_gen: v5e
topology: v5e:2x2
jax: 0.10.0
libtpu: 0.0.40
codegen_flags: <defaults>
</compile_context>

<pallas_src>
import jax
import jax.numpy as jnp
from jax.experimental import pallas as pl
from jax.experimental.pallas import tpu as pltpu


def _matmul_bias_relu_kernel(p_ref, w_ref, bias_ref, o_ref):
    """One MXU matmul + (folded-BN) bias + ReLU epilogue.

    p_ref    : (TM, K)      bf16  im2col patch rows (K = KH*KW*C_in)
    w_ref    : (K, C_out)   bf16  conv weight with BN scale folded in
    bias_ref : (1, C_out)   f32   folded BN bias
    o_ref    : (TM, C_out)  f32/bf16  output rows
    """
    acc = jnp.dot(p_ref[...], w_ref[...], preferred_element_type=jnp.float32)
    o_ref[...] = jnp.maximum(acc + bias_ref[...], 0.0).astype(o_ref.dtype)


def _pick_tile_m(m_total, k_dim, c_out, out_bytes):
    """Adaptive M tile.

    - >= MIN_STEPS grid steps so DMAs overlap and both v7x TensorCores get work.
    - multiples of 256 once M is large (full MXU N/M passes, lane-dense stores),
      multiples of 64 for small problems (bf16 sublane friendly).
    - stays inside a conservative double-buffered VMEM budget (v7x: 64 MiB phys).
    """
    MIN_STEPS = 8
    VMEM_BUDGET = 24 * 1024 * 1024

    def per_step_bytes(t):
        # double-buffered patches tile + output tile, resident weight + bias
        return (2 * (t * k_dim * 2 + t * c_out * out_bytes)
                + k_dim * c_out * 2 + c_out * 4)

    if m_total >= MIN_STEPS * 256:
        tile_m = 256
        while (m_total // (tile_m * 2) >= MIN_STEPS
               and per_step_bytes(tile_m * 2) <= VMEM_BUDGET):
            tile_m *= 2
    else:
        tile_m = max(64, pl.cdiv(pl.cdiv(m_total, MIN_STEPS), 64) * 64)
    while per_step_bytes(tile_m) > VMEM_BUDGET and tile_m > 64:
        tile_m //= 2
    return tile_m, per_step_bytes(tile_m)


def atrous_convolution_forward(x_nchw, weight_oihw, gamma, beta,
                               running_mean, running_var,
                               *, pad, dilation, eps=1e-5,
                               out_dtype=jnp.float32):
    """Forward pass matching Atrous_Convolution(x) in eval mode.

    x_nchw      : (N, C_in, H, W)        float32
    weight_oihw : (C_out, C_in, KH, KW)  float32 (PyTorch layout)
    returns     : (N, C_out, H_out, W_out) float32 (or out_dtype)
    """
    n, c_in, h, w = x_nchw.shape
    c_out, c_in_w, kh, kw = weight_oihw.shape
    assert c_in_w == c_in, "weight / input channel mismatch"
    assert kh == kw, "square kernel expected"

    h_out = h + 2 * pad - dilation * (kh - 1)
    w_out = w + 2 * pad - dilation * (kw - 1)
    assert h_out > 0 and w_out > 0, "non-positive output spatial size"

    # ---------------- glue (layout + im2col) in plain JAX, bf16 ----------------
    x_nhwc = jnp.transpose(x_nchw, (0, 2, 3, 1)).astype(jnp.bfloat16)  # (N,H,W,Cin)
    x_pad = jnp.pad(x_nhwc, ((0, 0), (pad, pad), (pad, pad), (0, 0)))

    # im2col: tap-major (i, j) then channel -> matches the
    # (KH, KW, C_in, C_out) -> (KH*KW*C_in, C_out) weight reshape below.
    cols = []
    for i in range(kh):
        for j in range(kw):
            cols.append(x_pad[:, i * dilation:i * dilation + h_out,
                              j * dilation:j * dilation + w_out, :])
    k_dim = kh * kw * c_in
    m_total = n * h_out * w_out
    patches = jnp.concatenate(cols, axis=-1).reshape(m_total, k_dim)  # bf16

    # Fold BatchNorm running stats: scale into the (f32) weights, bias stays in
    # the epilogue.  Kernel then computes relu(patches @ w_folded + bias).
    inv_std = 1.0 / jnp.sqrt(running_var.astype(jnp.float32) + eps)
    scale = (gamma.astype(jnp.float32) * inv_std)                       # (C_out,)
    bias = (beta.astype(jnp.float32)
            - running_mean.astype(jnp.float32) * scale).reshape(1, c_out)

    w_hwio = jnp.transpose(weight_oihw, (2, 3, 1, 0)).astype(jnp.float32)
    w_mat = (w_hwio * scale[None, None, None, :]).reshape(k_dim, c_out)
    w_mat = w_mat.astype(jnp.bfloat16)                                  # MXU-native

    # -------------------------- M tiling --------------------------------------
    out_bytes = jnp.dtype(out_dtype).itemsize
    tile_m, per_step_vmem = _pick_tile_m(m_total, k_dim, c_out, out_bytes)
    m_padded = pl.cdiv(m_total, tile_m) * tile_m
    if m_padded != m_total:
        patches = jnp.pad(patches, ((0, m_padded - m_total), (0, 0)))

    grid = (m_padded // tile_m,)
    cost = pl.CostEstimate(
        flops=2 * m_total * k_dim * c_out,
        transcendentals=0,
        bytes_accessed=(m_padded * k_dim * 2 + k_dim * c_out * 2
                        + c_out * 4 + m_padded * c_out * out_bytes))

    # Explicit scoped-VMEM limit: >= the double-buffered working set with 2x
    # headroom, never above 64 MiB (v7x physical VMEM per TensorCore).
    vmem_limit = int(min(64 * 1024 * 1024,
                         max(32 * 1024 * 1024, 2 * per_step_vmem)))

    out_flat = pl.pallas_call(
        _matmul_bias_relu_kernel,
        out_shape=jax.ShapeDtypeStruct((m_padded, c_out), out_dtype),
        grid_spec=pltpu.PrefetchScalarGridSpec(
            num_scalar_prefetch=0,
            grid=grid,
            in_specs=[
                pl.BlockSpec((tile_m, k_dim), lambda m: (m, 0)),   # patches tile
                pl.BlockSpec((k_dim, c_out), lambda m: (0, 0)),    # weight (resident)
                pl.BlockSpec((1, c_out), lambda m: (0, 0)),        # folded BN bias
            ],
            out_specs=pl.BlockSpec((tile_m, c_out), lambda m: (m, 0)),
        ),
        compiler_params=pltpu.CompilerParams(
            dimension_semantics=("parallel",),
            vmem_limit_bytes=vmem_limit),
        cost_estimate=cost,
    )(patches, w_mat, bias)

    # Padded tail rows are ReLU(bias) garbage; slice BEFORE reshaping.
    out_nhwc = out_flat[:m_total].reshape(n, h_out, w_out, c_out)
    return jnp.transpose(out_nhwc, (0, 3, 1, 2)).astype(jnp.float32)  # NCHW


if __name__ == "__main__":
    # Module hyper-params (small, consistent with the PyTorch module).
    N, C_IN, H, W = 2, 4, 16, 16
    C_OUT = 256                      # module default output_channels
    KSIZE, PAD, DIL = 3, 2, 2        # atrous conv: pad == dilation keeps H, W
    EPS = 1e-5

    key = jax.random.PRNGKey(0)
    kx, kw_, kg, kb, km, kv = jax.random.split(key, 6)

    x = jax.random.normal(kx, (N, C_IN, H, W), dtype=jnp.float32)
    weight = 0.1 * jax.random.normal(kw_, (C_OUT, C_IN, KSIZE, KSIZE), jnp.float32)
    gamma = 1.0 + 0.1 * jax.random.normal(kg, (C_OUT,), jnp.float32)
    beta = 0.1 * jax.random.normal(kb, (C_OUT,), jnp.float32)
    running_mean = 0.1 * jax.random.normal(km, (C_OUT,), jnp.float32)
    running_var = jnp.abs(1.0 + 0.1 * jax.random.normal(kv, (C_OUT,), jnp.float32))

    out = atrous_convolution_forward(
        x, weight, gamma, beta, running_mean, running_var,
        pad=PAD, dilation=DIL, eps=EPS)
    out = jax.block_until_ready(out)
    assert out.shape == (N, C_OUT, H, W), out.shape

    # ---- folded BN parameters (shared by both references) -------------------
    scale_ref = gamma / jnp.sqrt(running_var + EPS)
    bias_ref = beta - running_mean * scale_ref
    w_hwio = jnp.transpose(weight, (2, 3, 1, 0))                 # (KH,KW,Cin,Cout)

    # ---- tight reference: same bf16-rounded operands the kernel sees --------
    # (scale folded into weights before the bf16 cast, f32 math thereafter)
    x_bf = x.astype(jnp.bfloat16).astype(jnp.float32)
    w_folded_bf = (w_hwio * scale_ref[None, None, None, :]
                   ).astype(jnp.bfloat16).astype(jnp.float32)
    x_nhwc = jnp.transpose(x_bf, (0, 2, 3, 1))
    conv_bf = jax.lax.conv_general_dilated(
        x_nhwc, w_folded_bf, window_strides=(1, 1),
        padding=((PAD, PAD), (PAD, PAD)), rhs_dilation=(DIL, DIL),
        dimension_numbers=("NHWC", "HWIO", "NHWC"),
        precision=jax.lax.Precision.HIGHEST)
    ref_tight = jnp.maximum(conv_bf + bias_ref[None, None, None, :], 0.0)
    ref_tight = jnp.transpose(ref_tight, (0, 3, 1, 2))
    err_tight = float(jnp.max(jnp.abs(out - ref_tight)))
    assert err_tight < 2e-3, f"tight max abs error {err_tight}"

    # ---- loose reference: true f32 module semantics (conv -> BN -> ReLU) ----
    conv_f32 = jax.lax.conv_general_dilated(
        jnp.transpose(x, (0, 2, 3, 1)), w_hwio, window_strides=(1, 1),
        padding=((PAD, PAD), (PAD, PAD)), rhs_dilation=(DIL, DIL),
        dimension_numbers=("NHWC", "HWIO", "NHWC"),
        precision=jax.lax.Precision.HIGHEST)
    ref_full = jnp.maximum(conv_f32 * scale_ref[None, None, None, :]
                           + bias_ref[None, None, None, :], 0.0)
    ref_full = jnp.transpose(ref_full, (0, 3, 1, 2))
    err_full = float(jnp.max(jnp.abs(out - ref_full)))
    assert err_full < 1e-1, f"full-precision max abs error {err_full}"

    print("KERNEL_OK")
</pallas_src>

<mosaic_0001>
module attributes {stable_mosaic.version = 11 : i64} {
  func.func @_matmul_bias_relu_kernel(%arg0: i32, %arg1: memref<64x36xbf16, #tpu.memory_space<vmem>>, %arg2: memref<36x256xbf16, #tpu.memory_space<vmem>>, %arg3: memref<1x256xf32, #tpu.memory_space<vmem>>, %arg4: memref<64x256xf32, #tpu.memory_space<vmem>>) attributes {dimension_semantics = [#tpu.dimension_semantics<parallel>], iteration_bounds = array<i64: 8>, scalar_prefetch = 0 : i64, scratch_operands = 0 : i64, tpu.core_type = #tpu.core_type<tc>, window_params = [{transform_indices = @transform_0, window_bounds = array<i64: 64, 36>}, {pipeline_mode = #tpu.pipeline_mode<synchronous>, transform_indices = @transform_1, window_bounds = array<i64: 36, 256>}, {pipeline_mode = #tpu.pipeline_mode<synchronous>, transform_indices = @transform_2, window_bounds = array<i64: 1, 256>}, {transform_indices = @transform_3, window_bounds = array<i64: 64, 256>}]} {
    %c0 = arith.constant 0 : index
    %c0_0 = arith.constant 0 : index
    %0 = vector.load %arg1[%c0, %c0_0] : memref<64x36xbf16, #tpu.memory_space<vmem>>, vector<64x36xbf16>
    %c0_1 = arith.constant 0 : index
    %c0_2 = arith.constant 0 : index
    %1 = vector.load %arg2[%c0_1, %c0_2] : memref<36x256xbf16, #tpu.memory_space<vmem>>, vector<36x256xbf16>
    %cst = arith.constant dense<0.000000e+00> : vector<64x256xf32>
    %2 = tpu.matmul %0, %1, %cst {dimension_numbers = #tpu.dot_dimension_numbers<[1], [0], [0], [1], [0, 0, 1, 1], [], []>} : vector<64x36xbf16>, vector<36x256xbf16>, vector<64x256xf32> -> vector<64x256xf32>
    %c0_3 = arith.constant 0 : index
    %c0_4 = arith.constant 0 : index
    %3 = vector.load %arg3[%c0_3, %c0_4] : memref<1x256xf32, #tpu.memory_space<vmem>>, vector<1x256xf32>
    %4 = vector.broadcast %3 : vector<1x256xf32> to vector<64x256xf32>
    %5 = arith.addf %2, %4 : vector<64x256xf32>
    %cst_5 = arith.constant 0.000000e+00 : f32
    %6 = vector.broadcast %cst_5 : f32 to vector<64x256xf32>
    %7 = arith.maximumf %5, %6 : vector<64x256xf32>
    %c0_6 = arith.constant 0 : index
    %c0_7 = arith.constant 0 : index
    %8 = vector.load %arg4[%c0_6, %c0_7] : memref<64x256xf32, #tpu.memory_space<vmem>>, vector<64x256xf32>
    tpu.vector_store %arg4[%c0_6, %c0_7], %7 {strides = array<i32>} : memref<64x256xf32, #tpu.memory_space<vmem>>, vector<64x256xf32>,
    return
  }
  func.func @transform_0(%arg0: i32) -> (i32, i32) {
    %c0_i32 = arith.constant 0 : i32
    %c0_i32_0 = arith.constant 0 : i32
    return %arg0, %c0_i32 : i32, i32
  }
  func.func @transform_1(%arg0: i32) -> (i32, i32) {
    %c0_i32 = arith.constant 0 : i32
    %c0_i32_0 = arith.constant 0 : i32
    %c0_i32_1 = arith.constant 0 : i32
    return %c0_i32, %c0_i32_0 : i32, i32
  }
  func.func @transform_2(%arg0: i32) -> (i32, i32) {
    %c0_i32 = arith.constant 0 : i32
    %c0_i32_0 = arith.constant 0 : i32
    %c0_i32_1 = arith.constant 0 : i32
    return %c0_i32, %c0_i32_0 : i32, i32
  }
  func.func @transform_3(%arg0: i32) -> (i32, i32) {
    %c0_i32 = arith.constant 0 : i32
    %c0_i32_0 = arith.constant 0 : i32
    return %arg0, %c0_i32 : i32, i32
  }
}

</mosaic_0001>

<llo_original>
// kernel: tpu_custom_call.1
$region0: #{tpu_custom_call.1}
  #allocation0 [shape = 'u32[]', space=smem, size = 0x4, offset = 0x4, fixed_abs, tag = 'smem constant byte address 0x4 - core index']
  #allocation1 [shape = 'u32[72,128]{1,0:T(1,128)}', space=vmem, size = 0x9000, scoped, tag = 'internal scratch']
  %s0 = inlined_call_operand.vmem [shape: bf16[512,36], index: 0, kind: input, shape index: {}]
  %s1 = inlined_call_operand.vmem [shape: bf16[36,256], index: 1, kind: input, shape index: {}]
  %s2 = inlined_call_operand.vmem [shape: f32[1,256], index: 2, kind: input, shape index: {}]
  %s3 = inlined_call_operand.hbm [shape: f32[512,256], index: 3, kind: output, shape index: {}]
  %s4 = sld [smem:[#allocation0]]
  $region45: #{tpu_custom_call.1} parent=0
    _
  %s6 = ssub.s32 1, %s4
  %s7 = scalar_select 0, %s6, %s4
  $region1: #{tpu_custom_call.1} parent=0
    #allocation2 [shape = 'u8[131072]{0}', space=vmem, size = 0x20000, scoped, tag = 'output window, operand 0']
    #allocation3 [shape = 's32[2]{0}', space=sflag, size = 0x8, scoped, tag = 'scoped memory for tpu_custom_call.1']
    %8 = vsyncpa [#allocation3], 0
    %s9 = scalar_lea.sflag [#allocation3], 1
    %10 = vsyncpa %s9, 0
    loop: start=0, step=1, limit=10
    $region2: #{tpu_custom_call.1} parent=1 // loop_pre_header
      _
    $region3: #{tpu_custom_call.1} parent=1 // loop_header
      %s12 = sphi 0, %s16
      %p13 = scmp.ge.s32.totalorder %s12, 10
      %s22 = sphi 0, %s24
      %s25 = sphi 0, %s22
      %s26 = sphi 0, %s25
      %s42 = sphi 0, %s26
      %s46 = sphi 0, %s46
      %s48 = sphi 0, %s46
      %s49 = sphi 0, %s48
      %s63 = sphi 0, %s49
      %s67 = sphi 0, %s67
      %s69 = sphi 0, %s67
      %s70 = sphi 0, %s69
      %s84 = sphi 0, %s70
      %s90 = sphi 0, %s92
      %s93 = sphi 0, %s90
      %s94 = sphi 0, %s93
      %s110 = sphi 0, %s94
    $region4: #{tpu_custom_call.1} parent=1 // loop_header_branch
      %15 = sbr.rel (%p13) target = $region8
    $region5: #{tpu_custom_call.1} parent=1 // loop_body
      %s17 = ssub.s32 %s12, 1
      %s18 = ssub.s32 %s12, 2
      %s19 = sadd.s32 %s12, 1
      %s20 = ssub.s32 %s12, %s19
      %p21 = scmp.eq.s32.totalorder %s20, 0
      %s23 = sadd.s32 %s22, 1
      %s24 = scalar_select %p21, %s22, %s23
      %p27 = pneg %p21
      %p28 = scmp.eq.s32.totalorder %s12, 7
      %p29 = por %p27, %p28
      %p30 = scmp.ne.s32.totalorder %s22, %s25
      %p31 = scmp.eq.s32.totalorder %s12, 0
      %p32 = por %p30, %p31
      %p33 = scmp.ne.s32.totalorder %s22, %s25
      %p34 = scmp.eq.s32.totalorder %s17, 7
      %p35 = por %p33, %p34
      %p36 = scmp.ne.s32.totalorder %s25, %s26
      %p37 = scmp.eq.s32.totalorder %s17, 0
      %p38 = por %p36, %p37
      %p39 = scmp.ne.s32.totalorder %s25, %s26
      %p40 = scmp.eq.s32.totalorder %s18, 7
      %p41 = por %p39, %p40
      %p43 = scmp.ne.s32.totalorder %s26, %s42
      %p44 = scmp.eq.s32.totalorder %s18, 0
      %p45 = por %p43, %p44
      %s47 = sadd.s32 %s46, 1
      %p50 = scmp.eq.s32.totalorder %s12, 7
      %p51 = scmp.ne.s32.totalorder %s46, %s48
      %p52 = scmp.eq.s32.totalorder %s12, 0
      %p53 = por %p51, %p52
      %p54 = scmp.ne.s32.totalorder %s46, %s48
      %p55 = scmp.eq.s32.totalorder %s17, 7
      %p56 = por %p54, %p55
      %p57 = scmp.ne.s32.totalorder %s48, %s49
      %p58 = scmp.eq.s32.totalorder %s17, 0
      %p59 = por %p57, %p58
      %p60 = scmp.ne.s32.totalorder %s48, %s49
      %p61 = scmp.eq.s32.totalorder %s18, 7
      %p62 = por %p60, %p61
      %p64 = scmp.ne.s32.totalorder %s49, %s63
      %p65 = scmp.eq.s32.totalorder %s18, 0
      %p66 = por %p64, %p65
      %s68 = sadd.s32 %s67, 1
      %p71 = scmp.eq.s32.totalorder %s12, 7
      %p72 = scmp.ne.s32.totalorder %s67, %s69
      %p73 = scmp.eq.s32.totalorder %s12, 0
      %p74 = por %p72, %p73
      %p75 = scmp.ne.s32.totalorder %s67, %s69
      %p76 = scmp.eq.s32.totalorder %s17, 7
      %p77 = por %p75, %p76
      %p78 = scmp.ne.s32.totalorder %s69, %s70
      %p79 = scmp.eq.s32.totalorder %s17, 0
      %p80 = por %p78, %p79
      %p81 = scmp.ne.s32.totalorder %s69, %s70
      %p82 = scmp.eq.s32.totalorder %s18, 7
      %p83 = por %p81, %p82
      %p85 = scmp.ne.s32.totalorder %s70, %s84
      %p86 = scmp.eq.s32.totalorder %s18, 0
      %p87 = por %p85, %p86
      %s88 = ssub.s32 %s12, %s19
      %p89 = scmp.eq.s32.totalorder %s88, 0
      %s91 = sadd.s32 %s90, 1
      %s92 = scalar_select %p89, %s90, %s91
      %p95 = pneg %p89
      %p96 = scmp.eq.s32.totalorder %s12, 7
      %p97 = por %p95, %p96
      %p98 = scmp.ne.s32.totalorder %s90, %s93
      %p99 = scmp.eq.s32.totalorder %s12, 0
      %p100 = por %p98, %p99
      %p101 = scmp.ne.s32.totalorder %s90, %s93
      %p102 = scmp.eq.s32.totalorder %s17, 7
      %p103 = por %p101, %p102
      %p104 = scmp.ne.s32.totalorder %s93, %s94
      %p105 = scmp.eq.s32.totalorder %s17, 0
      %p106 = por %p104, %p105
      %p107 = scmp.ne.s32.totalorder %s93, %s94
      %p108 = scmp.eq.s32.totalorder %s18, 7
      %p109 = por %p107, %p108
      %p111 = scmp.ne.s32.totalorder %s94, %s110
      %p112 = scmp.eq.s32.totalorder %s18, 0
      %p113 = por %p111, %p112
      %p114 = scmp.le.s32.totalorder 1, %s12
      %p115 = scmp.lt.s32.totalorder %s12, 9
      %p116 = pnand %p114, %p115
      %p117 = pneg %p116
      // Predicated region
      $region9: #{tpu_custom_call.1} parent=5 // pred_check
        _
      $region10: #{tpu_custom_call.1} parent=5 // pred_check_branch
        %119 = sbr.rel (%p116) target = $region12
      $region11: #{tpu_custom_call.1} parent=5 // pred_region
        %s120 = ssub.s32 %s12, 1
        // Predicated region
        $region13: #{tpu_custom_call.1} parent=11 // pred_check
          %p121 = pneg %p59
        $region14: #{tpu_custom_call.1} parent=11 // pred_check_branch
          %123 = sbr.rel (%p121) target = $region16
        $region15: #{tpu_custom_call.1} parent=11 // pred_region
          _
        $region16: #{tpu_custom_call.1} parent=11 // pred_fallthru
          _
        // Predicated region
        $region17: #{tpu_custom_call.1} parent=11 // pred_check
          %p124 = pneg %p80
        $region18: #{tpu_custom_call.1} parent=11 // pred_check_branch
          %126 = sbr.rel (%p124) target = $region20
        $region19: #{tpu_custom_call.1} parent=11 // pred_region
          _
        $region20: #{tpu_custom_call.1} parent=11 // pred_fallthru
          _
      $region12: #{tpu_custom_call.1} parent=5 // pred_fallthru
        _
      %p127 = scmp.lt.s32.totalorder %s12, 8
      // Predicated region
      $region21: #{tpu_custom_call.1} parent=5 // pred_check
        %p128 = pneg %p127
      $region22: #{tpu_custom_call.1} parent=5 // pred_check_branch
        %130 = sbr.rel (%p128) target = $region24
      $region23: #{tpu_custom_call.1} parent=5 // pred_region
        // Predicated region
        $region25: #{tpu_custom_call.1} parent=23 // pred_check
          %p131 = pneg %p32
        $region26: #{tpu_custom_call.1} parent=23 // pred_check_branch
          %133 = sbr.rel (%p131) target = $region28
        $region27: #{tpu_custom_call.1} parent=23 // pred_region
          %s134 = smul.u32 8, %s12
          %p135 = scmp.lt.s32.totalorder %s134, 63
          %s136 = scalar_select %p135, %s134, 63
          %s137 = smul.addr %s136, 4
          %s138 = scalar_lea.vmem %s0, %s137
          %s139 = smul.u32 8, %s12
        $region28: #{tpu_custom_call.1} parent=23 // pred_fallthru
          _
      $region24: #{tpu_custom_call.1} parent=5 // pred_fallthru
        _
      %p140 = scmp.le.s32.totalorder 1, %s12
      %p141 = scmp.lt.s32.totalorder %s12, 9
      %p142 = pnand %p140, %p141
      %p143 = pneg %p142
      // Predicated region
      $region29: #{tpu_custom_call.1} parent=5 // pred_check
        _
      $region30: #{tpu_custom_call.1} parent=5 // pred_check_branch
        %145 = sbr.rel (%p142) target = $region32
      $region31: #{tpu_custom_call.1} parent=5 // pred_region
        %s146 = ssub.s32 %s12, 1
        %s147 = smul.u32 8, %s17
        %p148 = scmp.lt.s32.totalorder %s147, 63
        %s149 = scalar_select %p148, %s147, 63
        %s150 = smul.addr %s149, 4
        %s151 = scalar_lea.vmem %s0, %s150
        %p152 = pneg %p38
        %p153 = pneg %p35
        %p154 = pneg %p59
        %p155 = pneg %p56
        %p156 = pneg %p80
        %p157 = pneg %p77
        %p158 = pneg %p106
        %p159 = pneg %p103
        %s160 = sand.u32 %s93, 1
        %s161 = scalar_lea.sflag [#allocation3], %s160
        %s162 = sand.u32 %s93, 1
        %s163 = smul.addr %s162, 128
        %s164 = scalar_lea.vmem [#allocation2], %s163
        %s165 = smul.u32 8, %s17
        %p166 = scmp.lt.s32.totalorder %s165, 63
        %s167 = scalar_select %p166, %s165, 63
        %s168 = smul.addr %s167, 4
        %s169 = scalar_lea.vmem %s0, %s168
        %s170 = smul.u32 8, %s17
        %s171 = smul.u32 8, %s17
        %v173 = vld [vmem:[%s169] sm:$0xf]
        %v174 = vld [vmem:[%s169 + $0x4] sm:$0xf]
        %v175 = vld [vmem:[%s169 + $0x8] sm:$0xf]
        %v176 = vld [vmem:[%s169 + $0xc] sm:$0xf]
        %v177 = vld [vmem:[%s169 + $0x10] sm:$0xf]
        %v178 = vld [vmem:[%s169 + $0x14] sm:$0xf]
        %v179 = vld [vmem:[%s169 + $0x18] sm:$0xf]
        %v180 = vld [vmem:[%s169 + $0x1c] sm:$0xf]
        %v181 = vld [vmem:[%s1] sm:$0xff]
        %v182 = vld [vmem:[%s1 + $0x8] sm:$0xff]
        %v183 = vld [vmem:[%s1 + $0x10] sm:$0xff]
        %v184 = vld [vmem:[%s1 + $0x18] sm:$0xff]
        %v185 = vld [vmem:[%s1 + $0x20] sm:$0x33]
        %v186 = vld [vmem:[%s2] sm:$0x3]
        %v188 = vperm.slane %v186, 0
        %v189 = vperm.slane %v186, 1
        %v200 = vunpack.c.l.b16 %v173
        %v201 = vunpack.c.l.b16 %v174
        %v202 = vunpack.c.l.b16 %v175
        %v203 = vunpack.c.l.b16 %v176
        %v204 = vunpack.c.l.b16 %v177
        %v205 = vunpack.c.l.b16 %v178
        %v206 = vunpack.c.l.b16 %v179
        %v207 = vunpack.c.l.b16 %v180
        %v208 = vpack.c.b16 %v201, %v200
        %v209 = vpack.c.b16 %v203, %v202
        %v210 = vpack.c.b16 %v205, %v204
        %v211 = vpack.c.b16 %v207, %v206
        %v217 = vunpack.c.l.b16 %v181
        %v218 = vunpack.c.h.b16 %v181
        %v219 = vunpack.c.l.b16 %v182
        %v220 = vunpack.c.h.b16 %v182
        %v221 = vunpack.c.l.b16 %v183
        %v222 = vunpack.c.h.b16 %v183
        %v223 = vunpack.c.l.b16 %v184
        %v224 = vunpack.c.h.b16 %v184
        %v225 = vunpack.c.l.b16 %v185
        %v226 = vunpack.c.h.b16 %v185
        %v227 = vpack.c.b16 %v219, %v217
        %v228 = vpack.c.b16 %v220, %v218
        %v229 = vpack.c.b16 %v223, %v221
        %v230 = vpack.c.b16 %v224, %v222
        %v231 = vpack.c.b16 %v225, %v225
        %v232 = vpack.c.b16 %v226, %v226
        %vm237 = vcmask 293888
        %v239 = vsel %vm237, %v208, 0
        %v242 = vsel %vm237, %v209, 0
        %v245 = vsel %vm237, %v210, 0
        %v248 = vsel %vm237, %v211, 0
        %vm250 = vcmask 1041408
        %v252 = vsel %vm250, %v231, 0
        %v255 = vsel %vm250, %v232, 0
        %257 = vmatpush.bf16.msra.mxu0 0
        %258 = vmatpush.bf16.msra.mxu0 0
        %259 = vmatpush.bf16.msra.mxu0 0
        %260 = vmatpush.bf16.msra.mxu0 0
        %261 = vmatpush.bf16.msra.mxu0 0
        %262 = vmatpush.bf16.msra.mxu0 %v252
        %263 = vmatpush.bf16.msra.mxu0 %v229
        %264 = vmatpush.bf16.msra.mxu0 %v227
        %265 = vmatmul.bf16.gmra.mxu0 %v239
        %v266 = vpop.f32.mrf.mxu0
        %v267 = vadd.f32 %v188, %v266
        %v268 = vpop.f32.mrf.mxu0
        %v269 = vadd.f32 %v188, %v268
        %270 = vmatmul.bf16.gmra.mxu0 %v242
        %v271 = vpop.f32.mrf.mxu0
        %v272 = vadd.f32 %v188, %v271
        %v273 = vpop.f32.mrf.mxu0
        %v274 = vadd.f32 %v188, %v273
        %275 = vmatmul.bf16.gmra.mxu0 %v245
        %v276 = vpop.f32.mrf.mxu0
        %v277 = vadd.f32 %v188, %v276
        %v278 = vpop.f32.mrf.mxu0
        %v279 = vadd.f32 %v188, %v278
        %280 = vmatmul.bf16.gmra.mxu0 %v248
        %v281 = vpop.f32.mrf.mxu0
        %v282 = vadd.f32 %v188, %v281
        %v283 = vpop.f32.mrf.mxu0
        %v284 = vadd.f32 %v188, %v283
        %285 = vdwg.mxu0
        %286 = vmatpush.bf16.msra.mxu0 0
        %287 = vmatpush.bf16.msra.mxu0 0
        %288 = vmatpush.bf16.msra.mxu0 0
        %289 = vmatpush.bf16.msra.mxu0 0
        %290 = vmatpush.bf16.msra.mxu0 0
        %291 = vmatpush.bf16.msra.mxu0 %v255
        %292 = vmatpush.bf16.msra.mxu0 %v230
        %293 = vmatpush.bf16.msra.mxu0 %v228
        %294 = vmatmul.bf16.gmra.mxu0 %v239
        %v295 = vpop.f32.mrf.mxu0
        %v296 = vadd.f32 %v189, %v295
        %v297 = vpop.f32.mrf.mxu0
        %v298 = vadd.f32 %v189, %v297
        %299 = vmatmul.bf16.gmra.mxu0 %v242
        %v300 = vpop.f32.mrf.mxu0
        %v301 = vadd.f32 %v189, %v300
        %v302 = vpop.f32.mrf.mxu0
        %v303 = vadd.f32 %v189, %v302
        %304 = vmatmul.bf16.gmra.mxu0 %v245
        %v305 = vpop.f32.mrf.mxu0
        %v306 = vadd.f32 %v189, %v305
        %v307 = vpop.f32.mrf.mxu0
        %v308 = vadd.f32 %v189, %v307
        %309 = vmatmul.bf16.gmra.mxu0 %v248
        %v310 = vpop.f32.mrf.mxu0
        %v311 = vadd.f32 %v189, %v310
        %v312 = vpop.f32.mrf.mxu0
        %v313 = vadd.f32 %v189, %v312
        %314 = vdwg.mxu0
        %v315 = vmax.f32 %v267, 0.0
        %v316 = vmax.f32 %v296, 0.0
        %v317 = vmax.f32 %v269, 0.0
        %v318 = vmax.f32 %v298, 0.0
        %v319 = vmax.f32 %v272, 0.0
        %v320 = vmax.f32 %v301, 0.0
        %v321 = vmax.f32 %v274, 0.0
        %v322 = vmax.f32 %v303, 0.0
        %v323 = vmax.f32 %v277, 0.0
        %v324 = vmax.f32 %v306, 0.0
        %v325 = vmax.f32 %v279, 0.0
        %v326 = vmax.f32 %v308, 0.0
        %v327 = vmax.f32 %v282, 0.0
        %v328 = vmax.f32 %v311, 0.0
        %v329 = vmax.f32 %v284, 0.0
        %v330 = vmax.f32 %v313, 0.0
        %331 = vst [vmem:[%s164] sm:$0xff] %v315
        %332 = vst [vmem:[%s164 + $0x8] sm:$0xff] %v316
        %333 = vst [vmem:[%s164 + $0x10] sm:$0xff] %v317
        %334 = vst [vmem:[%s164 + $0x18] sm:$0xff] %v318
        %335 = vst [vmem:[%s164 + $0x20] sm:$0xff] %v319
        %336 = vst [vmem:[%s164 + $0x28] sm:$0xff] %v320
        %337 = vst [vmem:[%s164 + $0x30] sm:$0xff] %v321
        %338 = vst [vmem:[%s164 + $0x38] sm:$0xff] %v322
        %339 = vst [vmem:[%s164 + $0x40] sm:$0xff] %v323
        %340 = vst [vmem:[%s164 + $0x48] sm:$0xff] %v324
        %341 = vst [vmem:[%s164 + $0x50] sm:$0xff] %v325
        %342 = vst [vmem:[%s164 + $0x58] sm:$0xff] %v326
        %343 = vst [vmem:[%s164 + $0x60] sm:$0xff] %v327
        %344 = vst [vmem:[%s164 + $0x68] sm:$0xff] %v328
        %345 = vst [vmem:[%s164 + $0x70] sm:$0xff] %v329
        %346 = vst [vmem:[%s164 + $0x78] sm:$0xff] %v330
        %s347 = sand.u32 %s93, 1
        %s348 = scalar_lea.sflag [#allocation3], %s347
        %s349 = sand.u32 %s93, 1
        %s350 = smul.addr %s349, 128
        %s351 = scalar_lea.vmem [#allocation2], %s350
        // Predicated region
        $region33: #{tpu_custom_call.1} parent=31 // pred_check
          %p352 = pneg %p103
        $region34: #{tpu_custom_call.1} parent=31 // pred_check_branch
          %354 = sbr.rel (%p352) target = $region36
        $region35: #{tpu_custom_call.1} parent=31 // pred_region
          %s355 = smul.u32 8, %s17
          %357 = vsyncadd %s348, 0
          %s358 = smul.addr %s355, 2
          %s359 = smul.addr %s358, 8
          %s360 = scalar_lea.hbm %s3, %s359
          %s361 = sshll.u32 %s351, 4
          %s362 = int_to_ptr.vmem [resolvable:$true] %s361
          %s363 = sshll.u32 %s360, 4
          %s364 = int_to_ptr.hbm [resolvable:$true] %s363
          %369 = dma.vmem_to_hbm [thread:$0]  %s362, 2048, %s364, %s348, 256, 256, 16
        $region36: #{tpu_custom_call.1} parent=31 // pred_fallthru
          _
      $region32: #{tpu_custom_call.1} parent=5 // pred_fallthru
        _
      %p370 = scmp.le.s32.totalorder 2, %s12
      // Predicated region
      $region37: #{tpu_custom_call.1} parent=5 // pred_check
        %p371 = pneg %p370
      $region38: #{tpu_custom_call.1} parent=5 // pred_check_branch
        %373 = sbr.rel (%p371) target = $region40
      $region39: #{tpu_custom_call.1} parent=5 // pred_region
        %s374 = ssub.s32 %s12, 2
        // Predicated region
        $region41: #{tpu_custom_call.1} parent=39 // pred_check
          %p375 = pneg %p109
        $region42: #{tpu_custom_call.1} parent=39 // pred_check_branch
          %377 = sbr.rel (%p375) target = $region44
        $region43: #{tpu_custom_call.1} parent=39 // pred_region
          %s378 = sand.u32 %s94, 1
          %s379 = scalar_lea.sflag [#allocation3], %s378
          %s380 = sand.u32 %s94, 1
          %s381 = smul.addr %s380, 128
          %s382 = scalar_lea.vmem [#allocation2], %s381
          %384 = dma.done %s379, 2048
        $region44: #{tpu_custom_call.1} parent=39 // pred_fallthru
          _
      $region40: #{tpu_custom_call.1} parent=5 // pred_fallthru
        _
    $region6: #{tpu_custom_call.1} parent=1 // loop_footer
      %s16 = sadd.s32 1, %s12
    $region7: #{tpu_custom_call.1} parent=1 // loop_footer_branch
      %11 = sbr.rel target = $region3
    $region8: #{tpu_custom_call.1} parent=1 // loop_exit
      _
    %385 = vsyncpa [#allocation3], 1
    %s386 = scalar_lea.sflag [#allocation3], 1
    %387 = vsyncpa %s386, 1

</llo_original>
